<compile_context>
chip_gen: v7x
topology: tpu7x:2x2x1
jax: 0.10.0
libtpu: 0.0.40
codegen_flags: <defaults>
</compile_context>

<pallas_src>
import jax
import jax.numpy as jnp
from jax.experimental import pallas as pl
from jax.experimental.pallas import tpu as pltpu

NUM_H1 = 128
NUM_H2 = 64
LANE = 128


def _round_up(n, m):
    return ((n + m - 1) // m) * m


# --------------------------------------------------------------------------- #
# Kernel: one batch tile -> one lane-dense bf16 output slab
# --------------------------------------------------------------------------- #
def exo_fused_kernel(x_ref, w1_ref, b1_ref, w2_ref, b2_ref, w3_ref, b3_ref,
                     out_ref):
    # bf16 only at the MXU boundary; elementwise (bias+ReLU) stays f32 (v5e VPU).
    x = x_ref[...].astype(jnp.bfloat16)                                 # (TB, S)
    h1 = jnp.dot(x, w1_ref[...], preferred_element_type=jnp.float32)    # (TB, 256)
    h1 = jnp.maximum(h1 + b1_ref[...], 0.0)
    h2 = jnp.dot(h1.astype(jnp.bfloat16), w2_ref[...],
                 preferred_element_type=jnp.float32)                    # (TB, 128)
    h2 = jnp.maximum(h2 + b2_ref[...], 0.0)
    out = jnp.dot(h2.astype(jnp.bfloat16), w3_ref[...],
                  preferred_element_type=jnp.float32)                   # (TB, out_pad)
    out_ref[...] = (out + b3_ref[...]).astype(out_ref.dtype)            # bf16 slab


# --------------------------------------------------------------------------- #
# Parameter init (PyTorch nn.Linear default) and packing
# --------------------------------------------------------------------------- #
def _linear_init(key, fan_in, fan_out):
    """PyTorch nn.Linear default init: U(-1/sqrt(fan_in), 1/sqrt(fan_in))."""
    kw, kb = jax.random.split(key)
    bound = 1.0 / jnp.sqrt(float(fan_in))
    # stored as (in, out) so the kernel computes x @ W + b
    w = jax.random.uniform(kw, (fan_in, fan_out), jnp.float32, -bound, bound)
    b = jax.random.uniform(kb, (1, fan_out), jnp.float32, -bound, bound)
    return w, b


def init_params(key, num_states, num_actions):
    keys = jax.random.split(key, 6)
    w1p, b1p = _linear_init(keys[0], num_states, NUM_H1)
    w2p, b2p = _linear_init(keys[1], NUM_H1, NUM_H2)
    w3p, b3p = _linear_init(keys[2], NUM_H2, num_actions)
    w1v, b1v = _linear_init(keys[3], num_states, NUM_H1)
    w2v, b2v = _linear_init(keys[4], NUM_H1, NUM_H2)
    w3v, b3v = _linear_init(keys[5], NUM_H2, 1)
    log_std = jnp.zeros((1, num_actions), jnp.float32)  # nn.Parameter(zeros(A))
    return dict(
        w1p=w1p, b1p=b1p, w2p=w2p, b2p=b2p, w3p=w3p, b3p=b3p,
        w1v=w1v, b1v=b1v, w2v=w2v, b2v=b2v, w3v=w3v, b3v=b3v,
        log_std=log_std,
    )


def pack_params(p, num_actions):
    """Pack the 6 small layers into 3 wide, lane-aligned matrices (done once).

    Weights are stored in bf16 (MXU-native); biases stay f32 (added on the VPU).
    """
    A = num_actions
    out_pad = max(LANE, _round_up(A + 1, LANE))

    # layer 1: shared input x, concatenate along the output (lane) axis
    w1 = jnp.concatenate([p["w1p"], p["w1v"]], axis=1)            # (S, 256)
    b1 = jnp.concatenate([p["b1p"], p["b1v"]], axis=1)            # (1, 256)

    # layer 2: block-diagonal so the branches stay independent
    z = jnp.zeros((NUM_H1, NUM_H2), jnp.float32)
    w2 = jnp.concatenate(
        [jnp.concatenate([p["w2p"], z], axis=1),
         jnp.concatenate([z, p["w2v"]], axis=1)], axis=0)         # (256, 128)
    b2 = jnp.concatenate([p["b2p"], p["b2v"]], axis=1)            # (1, 128)

    # layer 3: one padded head. Slab column layout:
    #   [0:A]     p_mean  (rows 0:64   = w3p)
    #   [A:A+1]   value   (rows 64:128 = w3v)
    #   [A+1:]    padding (zeros)
    # (p_std is x-independent and handled in the wrapper — no kernel round-trip.)
    w3 = jnp.zeros((2 * NUM_H2, out_pad), jnp.float32)
    w3 = w3.at[:NUM_H2, :A].set(p["w3p"])
    w3 = w3.at[NUM_H2:, A:A + 1].set(p["w3v"])
    b3 = jnp.zeros((1, out_pad), jnp.float32)
    b3 = b3.at[:, :A].set(p["b3p"])
    b3 = b3.at[:, A:A + 1].set(p["b3v"])

    return dict(
        w1=w1.astype(jnp.bfloat16), b1=b1,
        w2=w2.astype(jnp.bfloat16), b2=b2,
        w3=w3.astype(jnp.bfloat16), b3=b3,
        log_std=p["log_std"],
    )


# --------------------------------------------------------------------------- #
# Wrapper
# --------------------------------------------------------------------------- #
def _pick_batch_tile(B, tile_b):
    """Batch tile: >=4 tiles when B allows it (feeds both v7x TensorCores),
    multiple of 16 (bf16-native sublane tiling for the output slab), capped at tile_b."""
    if B <= 16:
        return B if B % 8 == 0 else _round_up(B, 8)
    tb = max(16, _round_up(pl.cdiv(B, 4), 16))
    return min(tb, tile_b, _round_up(B, 16))


def simulation_exo_nn_forward(x, packed, num_actions, tile_b=2048):
    """Returns (p_mean, p_std, v) — the Normal's (loc, scale) plus the value head."""
    B, S = x.shape
    A = num_actions
    out_pad = packed["w3"].shape[1]

    tb = _pick_batch_tile(B, tile_b)
    grid = (pl.cdiv(B, tb),)

    def resident(arr):
        # weights/biases: same block every grid step -> stay VMEM-resident
        return pl.BlockSpec(arr.shape, lambda i: (0, 0))

    # Advisory cost model (review: helps XLA schedule this small kernel).
    weight_bytes = sum(int(packed[k].size) * packed[k].dtype.itemsize
                       for k in ("w1", "b1", "w2", "b2", "w3", "b3"))
    flops = 2 * B * (S * 2 * NUM_H1 + (2 * NUM_H1) * (2 * NUM_H2)
                     + (2 * NUM_H2) * out_pad)
    bytes_accessed = B * (S * 4 + out_pad * 2) + weight_bytes
    cost = pl.CostEstimate(flops=flops, transcendentals=0,
                           bytes_accessed=bytes_accessed)

    # Explicit VMEM budget (x tile is lane-padded to 128 in VMEM even though S=16).
    vmem_bytes = (
        2 * tb * LANE * 4                     # x tiles, double-buffered, lane-padded
        + 2 * tb * out_pad * 2                # bf16 output slab tiles, double-buffered
        + tb * (2 * NUM_H1 * 6 + 2 * NUM_H2 * 6)  # h1/h2 f32 + bf16 casts
        + 2 * weight_bytes + (1 << 20)        # resident weights/biases + slack
    )
    vmem_limit = int(min(48 << 20, max(16 << 20, 2 * vmem_bytes)))

    slab = pl.pallas_call(
        exo_fused_kernel,
        out_shape=jax.ShapeDtypeStruct((B, out_pad), jnp.bfloat16),
        grid=grid,
        in_specs=[
            pl.BlockSpec((tb, S), lambda i: (i, 0)),   # x: tiled over batch
            resident(packed["w1"]), resident(packed["b1"]),
            resident(packed["w2"]), resident(packed["b2"]),
            resident(packed["w3"]), resident(packed["b3"]),
        ],
        out_specs=pl.BlockSpec((tb, out_pad), lambda i: (i, 0)),  # lane-dense slab
        compiler_params=pltpu.CompilerParams(
            dimension_semantics=("parallel",),
            vmem_limit_bytes=vmem_limit),
        cost_estimate=cost,
    )(x, packed["w1"], packed["b1"], packed["w2"], packed["b2"],
      packed["w3"], packed["b3"])

    # Column slices live in the same jit as the kernel so XLA fuses them.
    p_mean = slab[:, :A]
    v = slab[:, A:A + 1]
    # p_std is x-independent: computed once here, never round-tripped via HBM.
    p_std = jnp.broadcast_to(jnp.exp(packed["log_std"]), (B, A))
    return p_mean, p_std, v


# --------------------------------------------------------------------------- #
# Pure-JAX reference mirroring the PyTorch forward (f32)
# --------------------------------------------------------------------------- #
def reference_forward(x, p):
    h = jnp.maximum(x @ p["w1p"] + p["b1p"], 0.0)
    h = jnp.maximum(h @ p["w2p"] + p["b2p"], 0.0)
    p_mean = h @ p["w3p"] + p["b3p"]
    p_std = jnp.broadcast_to(jnp.exp(p["log_std"]), p_mean.shape)
    hv = jnp.maximum(x @ p["w1v"] + p["b1v"], 0.0)
    hv = jnp.maximum(hv @ p["w2v"] + p["b2v"], 0.0)
    v = hv @ p["w3v"] + p["b3v"]
    return p_mean, p_std, v


if __name__ == "__main__":
    num_states = 16
    num_actions = 4
    batch = 8

    key = jax.random.PRNGKey(0)
    k_params, k_x, k_x2 = jax.random.split(key, 3)
    params = init_params(k_params, num_states, num_actions)
    packed = pack_params(params, num_actions)

    fwd = jax.jit(simulation_exo_nn_forward,
                  static_argnames=("num_actions", "tile_b"))

    # bf16 matmul operands + bf16 output slab -> relaxed tolerances vs f32 reference.
    TOL = dict(atol=3e-2, rtol=3e-2)

    # small-batch check (single tile)
    x = jax.random.normal(k_x, (batch, num_states), jnp.float32)
    p_mean, p_std, v = jax.block_until_ready(
        fwd(x, packed, num_actions=num_actions))
    rm, rs, rv = reference_forward(x, params)
    assert p_mean.shape == (batch, num_actions)
    assert p_std.shape == (batch, num_actions)
    assert v.shape == (batch, 1)
    assert jnp.allclose(p_mean.astype(jnp.float32), rm, **TOL)
    assert jnp.allclose(p_std, rs, atol=1e-6, rtol=1e-6)  # x-independent, exact path
    assert jnp.allclose(v.astype(jnp.float32), rv, **TOL)

    # grid check: >=4 batch tiles + a partial last tile (RL-rollout style)
    big_b = 1040
    x2 = jax.random.normal(k_x2, (big_b, num_states), jnp.float32)
    p_mean2, p_std2, v2 = jax.block_until_ready(
        fwd(x2, packed, num_actions=num_actions))
    rm2, rs2, rv2 = reference_forward(x2, params)
    assert jnp.allclose(p_mean2.astype(jnp.float32), rm2, **TOL)
    assert jnp.allclose(p_std2, rs2, atol=1e-6, rtol=1e-6)
    assert jnp.allclose(v2.astype(jnp.float32), rv2, **TOL)

    # TODO(synk): torch.distributions.Normal object itself has no Pallas
    # equivalent; the kernel returns its (loc, scale) parameters instead.
    print("KERNEL_OK")
</pallas_src>

<mosaic_0001>
module attributes {stable_mosaic.version = 11 : i64} {
  func.func @exo_fused_kernel(%arg0: i32, %arg1: memref<8x16xf32, #tpu.memory_space<vmem>>, %arg2: memref<16x256xbf16, #tpu.memory_space<vmem>>, %arg3: memref<1x256xf32, #tpu.memory_space<vmem>>, %arg4: memref<256x128xbf16, #tpu.memory_space<vmem>>, %arg5: memref<1x128xf32, #tpu.memory_space<vmem>>, %arg6: memref<128x128xbf16, #tpu.memory_space<vmem>>, %arg7: memref<1x128xf32, #tpu.memory_space<vmem>>, %arg8: memref<8x128xbf16, #tpu.memory_space<vmem>>) attributes {dimension_semantics = [#tpu.dimension_semantics<parallel>], iteration_bounds = array<i64: 1>, scalar_prefetch = 0 : i64, scratch_operands = 0 : i64, tpu.core_type = #tpu.core_type<tc>, window_params = [{transform_indices = @transform_0, window_bounds = array<i64: 8, 16>}, {pipeline_mode = #tpu.pipeline_mode<synchronous>, transform_indices = @transform_1, window_bounds = array<i64: 16, 256>}, {pipeline_mode = #tpu.pipeline_mode<synchronous>, transform_indices = @transform_2, window_bounds = array<i64: 1, 256>}, {pipeline_mode = #tpu.pipeline_mode<synchronous>, transform_indices = @transform_3, window_bounds = array<i64: 256, 128>}, {pipeline_mode = #tpu.pipeline_mode<synchronous>, transform_indices = @transform_4, window_bounds = array<i64: 1, 128>}, {pipeline_mode = #tpu.pipeline_mode<synchronous>, transform_indices = @transform_5, window_bounds = array<i64: 128, 128>}, {pipeline_mode = #tpu.pipeline_mode<synchronous>, transform_indices = @transform_6, window_bounds = array<i64: 1, 128>}, {transform_indices = @transform_7, window_bounds = array<i64: 8, 128>}]} {
    %c0 = arith.constant 0 : index
    %c0_0 = arith.constant 0 : index
    %0 = vector.load %arg1[%c0, %c0_0] : memref<8x16xf32, #tpu.memory_space<vmem>>, vector<8x16xf32>
    %1 = arith.truncf %0 : vector<8x16xf32> to vector<8x16xbf16>
    %c0_1 = arith.constant 0 : index
    %c0_2 = arith.constant 0 : index
    %2 = vector.load %arg2[%c0_1, %c0_2] : memref<16x256xbf16, #tpu.memory_space<vmem>>, vector<16x256xbf16>
    %cst = arith.constant dense<0.000000e+00> : vector<8x256xf32>
    %3 = tpu.matmul %1, %2, %cst {dimension_numbers = #tpu.dot_dimension_numbers<[1], [0], [0], [1], [0, 0, 1, 1], [], []>} : vector<8x16xbf16>, vector<16x256xbf16>, vector<8x256xf32> -> vector<8x256xf32>
    %c0_3 = arith.constant 0 : index
    %c0_4 = arith.constant 0 : index
    %4 = vector.load %arg3[%c0_3, %c0_4] : memref<1x256xf32, #tpu.memory_space<vmem>>, vector<1x256xf32>
    %5 = vector.broadcast %4 : vector<1x256xf32> to vector<8x256xf32>
    %6 = arith.addf %3, %5 : vector<8x256xf32>
    %cst_5 = arith.constant 0.000000e+00 : f32
    %7 = vector.broadcast %cst_5 : f32 to vector<8x256xf32>
    %8 = arith.maximumf %6, %7 : vector<8x256xf32>
    %9 = arith.truncf %8 : vector<8x256xf32> to vector<8x256xbf16>
    %c0_6 = arith.constant 0 : index
    %c0_7 = arith.constant 0 : index
    %10 = vector.load %arg4[%c0_6, %c0_7] : memref<256x128xbf16, #tpu.memory_space<vmem>>, vector<256x128xbf16>
    %cst_8 = arith.constant dense<0.000000e+00> : vector<8x128xf32>
    %11 = tpu.matmul %9, %10, %cst_8 {dimension_numbers = #tpu.dot_dimension_numbers<[1], [0], [0], [1], [0, 0, 1, 1], [], []>} : vector<8x256xbf16>, vector<256x128xbf16>, vector<8x128xf32> -> vector<8x128xf32>
    %c0_9 = arith.constant 0 : index
    %c0_10 = arith.constant 0 : index
    %12 = vector.load %arg5[%c0_9, %c0_10] : memref<1x128xf32, #tpu.memory_space<vmem>>, vector<1x128xf32>
    %13 = vector.broadcast %12 : vector<1x128xf32> to vector<8x128xf32>
    %14 = arith.addf %11, %13 : vector<8x128xf32>
    %cst_11 = arith.constant 0.000000e+00 : f32
    %15 = vector.broadcast %cst_11 : f32 to vector<8x128xf32>
    %16 = arith.maximumf %14, %15 : vector<8x128xf32>
    %17 = arith.truncf %16 : vector<8x128xf32> to vector<8x128xbf16>
    %c0_12 = arith.constant 0 : index
    %c0_13 = arith.constant 0 : index
    %18 = vector.load %arg6[%c0_12, %c0_13] : memref<128x128xbf16, #tpu.memory_space<vmem>>, vector<128x128xbf16>
    %cst_14 = arith.constant dense<0.000000e+00> : vector<8x128xf32>
    %19 = tpu.matmul %17, %18, %cst_14 {dimension_numbers = #tpu.dot_dimension_numbers<[1], [0], [0], [1], [0, 0, 1, 1], [], []>} : vector<8x128xbf16>, vector<128x128xbf16>, vector<8x128xf32> -> vector<8x128xf32>
    %c0_15 = arith.constant 0 : index
    %c0_16 = arith.constant 0 : index
    %20 = vector.load %arg7[%c0_15, %c0_16] : memref<1x128xf32, #tpu.memory_space<vmem>>, vector<1x128xf32>
    %21 = vector.broadcast %20 : vector<1x128xf32> to vector<8x128xf32>
    %22 = arith.addf %19, %21 : vector<8x128xf32>
    %23 = arith.truncf %22 : vector<8x128xf32> to vector<8x128xbf16>
    %c0_17 = arith.constant 0 : index
    %c0_18 = arith.constant 0 : index
    %24 = vector.load %arg8[%c0_17, %c0_18] : memref<8x128xbf16, #tpu.memory_space<vmem>>, vector<8x128xbf16>
    tpu.vector_store %arg8[%c0_17, %c0_18], %23 {strides = array<i32>} : memref<8x128xbf16, #tpu.memory_space<vmem>>, vector<8x128xbf16>,
    return
  }
  func.func @transform_0(%arg0: i32) -> (i32, i32) {
    %c0_i32 = arith.constant 0 : i32
    %c0_i32_0 = arith.constant 0 : i32
    return %arg0, %c0_i32 : i32, i32
  }
  func.func @transform_1(%arg0: i32) -> (i32, i32) {
    %c0_i32 = arith.constant 0 : i32
    %c0_i32_0 = arith.constant 0 : i32
    %c0_i32_1 = arith.constant 0 : i32
    return %c0_i32, %c0_i32_0 : i32, i32
  }
  func.func @transform_2(%arg0: i32) -> (i32, i32) {
    %c0_i32 = arith.constant 0 : i32
    %c0_i32_0 = arith.constant 0 : i32
    %c0_i32_1 = arith.constant 0 : i32
    return %c0_i32, %c0_i32_0 : i32, i32
  }
  func.func @transform_3(%arg0: i32) -> (i32, i32) {
    %c0_i32 = arith.constant 0 : i32
    %c0_i32_0 = arith.constant 0 : i32
    %c0_i32_1 = arith.constant 0 : i32
    return %c0_i32, %c0_i32_0 : i32, i32
  }
  func.func @transform_4(%arg0: i32) -> (i32, i32) {
    %c0_i32 = arith.constant 0 : i32
    %c0_i32_0 = arith.constant 0 : i32
    %c0_i32_1 = arith.constant 0 : i32
    return %c0_i32, %c0_i32_0 : i32, i32
  }
  func.func @transform_5(%arg0: i32) -> (i32, i32) {
    %c0_i32 = arith.constant 0 : i32
    %c0_i32_0 = arith.constant 0 : i32
    %c0_i32_1 = arith.constant 0 : i32
    return %c0_i32, %c0_i32_0 : i32, i32
  }
  func.func @transform_6(%arg0: i32) -> (i32, i32) {
    %c0_i32 = arith.constant 0 : i32
    %c0_i32_0 = arith.constant 0 : i32
    %c0_i32_1 = arith.constant 0 : i32
    return %c0_i32, %c0_i32_0 : i32, i32
  }
  func.func @transform_7(%arg0: i32) -> (i32, i32) {
    %c0_i32 = arith.constant 0 : i32
    %c0_i32_0 = arith.constant 0 : i32
    return %arg0, %c0_i32 : i32, i32
  }
}

</mosaic_0001>

<llo_original>
// kernel: simulation_exo_nn_forward.1
$region0: #{simulation_exo_nn_forward.1}
  #allocation0 [shape = 'u32[]', space=smem, size = 0x4, offset = 0x4, fixed_abs, tag = 'smem constant byte address 0x4 - core index']
  #allocation1 [shape = 'u32[144,128]{1,0:T(1,128)}', space=vmem, size = 0x12000, scoped, tag = 'internal scratch']
  %s0 = inlined_call_operand.hbm [shape: f32[8,16], index: 0, kind: input, shape index: {}]
  %s1 = inlined_call_operand.hbm [shape: bf16[16,256], index: 1, kind: input, shape index: {}]
  %s2 = inlined_call_operand.vmem [shape: f32[1,256], index: 2, kind: input, shape index: {}]
  %s3 = inlined_call_operand.hbm [shape: bf16[256,128], index: 3, kind: input, shape index: {}]
  %s4 = inlined_call_operand.vmem [shape: f32[1,128], index: 4, kind: input, shape index: {}]
  %s5 = inlined_call_operand.hbm [shape: bf16[128,128], index: 5, kind: input, shape index: {}]
  %s6 = inlined_call_operand.vmem [shape: f32[1,128], index: 6, kind: input, shape index: {}]
  %s7 = inlined_call_operand.vmem [shape: bf16[8,128], index: 7, kind: output, shape index: {}]
  %s8 = sld [smem:[#allocation0]]
  $region54: #{simulation_exo_nn_forward.1} parent=0
    _
  %s10 = ssub.s32 1, %s8
  %s11 = scalar_select 0, %s10, %s8
  $region1: #{simulation_exo_nn_forward.1} parent=0
    #allocation2 [shape = 'u8[4096]{0}', space=vmem, size = 0x1000, scoped, tag = 'input window, operand 0, single buffered']
    #allocation3 [shape = 's32[1]{0}', space=sflag, size = 0x4, scoped, tag = 'scoped memory for simulation_exo_nn_forward.1']
    #allocation4 [shape = 'u8[8192]{0}', space=vmem, size = 0x2000, scoped, tag = 'input window, operand 1, single buffered']
    #allocation5 [shape = 's32[1]{0}', space=sflag, size = 0x4, scoped, tag = 'scoped memory for simulation_exo_nn_forward.1']
    #allocation6 [shape = 'u8[65536]{0}', space=vmem, size = 0x10000, scoped, tag = 'input window, operand 3, single buffered']
    #allocation7 [shape = 'u8[32768]{0}', space=vmem, size = 0x8000, scoped, tag = 'input window, operand 5, single buffered']
    #allocation8 [shape = 's32[1]{0}', space=sflag, size = 0x4, scoped, tag = 'scoped memory for simulation_exo_nn_forward.1']
    %12 = vsyncpa [#allocation3], 0
    %13 = vsyncpa [#allocation5], 0
    %14 = vsyncpa [#allocation8], 0
    // Predicated region
    $region2: #{simulation_exo_nn_forward.1} parent=1 // pred_check
      _
    $region3: #{simulation_exo_nn_forward.1} parent=1 // pred_check_branch
      %16 = sbr.rel (0) target = $region5
    $region4: #{simulation_exo_nn_forward.1} parent=1 // pred_region
      %s18 = ssub.s32 128, 128
      %19 = vsyncadd [#allocation3], %s18
      %s21 = sshll.u32 [#allocation2], 4
      %s22 = int_to_ptr.vmem [resolvable:$true] %s21
      %24 = dma.hbm_to_vmem [thread:$0]  %s0, 128, %s22, [#allocation3]
    $region5: #{simulation_exo_nn_forward.1} parent=1 // pred_fallthru
      _
    // Predicated region
    $region6: #{simulation_exo_nn_forward.1} parent=1 // pred_check
      _
    $region7: #{simulation_exo_nn_forward.1} parent=1 // pred_check_branch
      %26 = sbr.rel (0) target = $region9
    $region8: #{simulation_exo_nn_forward.1} parent=1 // pred_region
      %s28 = ssub.s32 256, 256
      %29 = vsyncadd [#allocation5], %s28
      %s30 = sshll.u32 [#allocation4], 4
      %s31 = int_to_ptr.vmem [resolvable:$true] %s30
      %36 = dma.hbm_to_vmem [thread:$0]  %s1, 256, %s31, [#allocation5], 128, 128, 8
    $region9: #{simulation_exo_nn_forward.1} parent=1 // pred_fallthru
      _
    // Predicated region
    $region10: #{simulation_exo_nn_forward.1} parent=1 // pred_check
      _
    $region11: #{simulation_exo_nn_forward.1} parent=1 // pred_check_branch
      %38 = sbr.rel (0) target = $region13
    $region12: #{simulation_exo_nn_forward.1} parent=1 // pred_region
      _
    $region13: #{simulation_exo_nn_forward.1} parent=1 // pred_fallthru
      _
    // Predicated region
    $region14: #{simulation_exo_nn_forward.1} parent=1 // pred_check
      _
    $region15: #{simulation_exo_nn_forward.1} parent=1 // pred_check_branch
      %40 = sbr.rel (0) target = $region17
    $region16: #{simulation_exo_nn_forward.1} parent=1 // pred_region
      %s42 = ssub.s32 2048, 2048
      %43 = vsyncadd [#allocation5], %s42
      %s44 = sshll.u32 [#allocation6], 4
      %s45 = int_to_ptr.vmem [resolvable:$true] %s44
      %50 = dma.hbm_to_vmem [thread:$0]  %s3, 2048, %s45, [#allocation5], 64, 64, 4
    $region17: #{simulation_exo_nn_forward.1} parent=1 // pred_fallthru
      _
    // Predicated region
    $region18: #{simulation_exo_nn_forward.1} parent=1 // pred_check
      _
    $region19: #{simulation_exo_nn_forward.1} parent=1 // pred_check_branch
      %52 = sbr.rel (0) target = $region21
    $region20: #{simulation_exo_nn_forward.1} parent=1 // pred_region
      _
    $region21: #{simulation_exo_nn_forward.1} parent=1 // pred_fallthru
      _
    // Predicated region
    $region22: #{simulation_exo_nn_forward.1} parent=1 // pred_check
      _
    $region23: #{simulation_exo_nn_forward.1} parent=1 // pred_check_branch
      %54 = sbr.rel (0) target = $region25
    $region24: #{simulation_exo_nn_forward.1} parent=1 // pred_region
      %s56 = ssub.s32 1024, 1024
      %57 = vsyncadd [#allocation8], %s56
      %s58 = sshll.u32 [#allocation7], 4
      %s59 = int_to_ptr.vmem [resolvable:$true] %s58
      %64 = dma.hbm_to_vmem [thread:$0]  %s5, 1024, %s59, [#allocation8], 64, 64, 4
    $region25: #{simulation_exo_nn_forward.1} parent=1 // pred_fallthru
      _
    // Predicated region
    $region26: #{simulation_exo_nn_forward.1} parent=1 // pred_check
      _
    $region27: #{simulation_exo_nn_forward.1} parent=1 // pred_check_branch
      %66 = sbr.rel (0) target = $region29
    $region28: #{simulation_exo_nn_forward.1} parent=1 // pred_region
      _
    $region29: #{simulation_exo_nn_forward.1} parent=1 // pred_fallthru
      _
    // Predicated region
    $region30: #{simulation_exo_nn_forward.1} parent=1 // pred_check
      _
    $region31: #{simulation_exo_nn_forward.1} parent=1 // pred_check_branch
      %68 = sbr.rel (0) target = $region33
    $region32: #{simulation_exo_nn_forward.1} parent=1 // pred_region
      %69 = dma.done [#allocation3], 128
    $region33: #{simulation_exo_nn_forward.1} parent=1 // pred_fallthru
      _
    // Predicated region
    $region34: #{simulation_exo_nn_forward.1} parent=1 // pred_check
      _
    $region35: #{simulation_exo_nn_forward.1} parent=1 // pred_check_branch
      %71 = sbr.rel (0) target = $region37
    $region36: #{simulation_exo_nn_forward.1} parent=1 // pred_region
      %72 = dma.done [#allocation5], 256
    $region37: #{simulation_exo_nn_forward.1} parent=1 // pred_fallthru
      _
    // Predicated region
    $region38: #{simulation_exo_nn_forward.1} parent=1 // pred_check
      _
    $region39: #{simulation_exo_nn_forward.1} parent=1 // pred_check_branch
      %74 = sbr.rel (0) target = $region41
    $region40: #{simulation_exo_nn_forward.1} parent=1 // pred_region
      %75 = dma.done [#allocation5], 2048
    $region41: #{simulation_exo_nn_forward.1} parent=1 // pred_fallthru
      _
    // Predicated region
    $region42: #{simulation_exo_nn_forward.1} parent=1 // pred_check
      _
    $region43: #{simulation_exo_nn_forward.1} parent=1 // pred_check_branch
      %77 = sbr.rel (0) target = $region45
    $region44: #{simulation_exo_nn_forward.1} parent=1 // pred_region
      %78 = dma.done [#allocation8], 1024
    $region45: #{simulation_exo_nn_forward.1} parent=1 // pred_fallthru
      _
    %v80 = vld [vmem:[#allocation2] sm:$0xff]
    %v81 = vpack.c.bf16 %v80, %v80
    %v82 = vld [vmem:[#allocation4] sm:$0xff]
    %v83 = vld [vmem:[#allocation4 + $0x8] sm:$0xff]
    %v84 = vld [vmem:[%s2] sm:$0x3]
    %v86 = vlaneseq
    %v87 = vshrl.u32 %v86, 7
    %v88 = vsub.s32 0, %v87
    %v89 = vrot.slane %v84, %v88
    %v90 = vlaneseq
    %v91 = vshrl.u32 %v90, 7
    %v92 = vsub.s32 1, %v91
    %v93 = vrot.slane %v84, %v92
    %v98 = vunpack.c.l.b16 %v82
    %v99 = vunpack.c.h.b16 %v82
    %v100 = vunpack.c.l.b16 %v83
    %v101 = vunpack.c.h.b16 %v83
    %v102 = vpack.c.b16 %v100, %v98
    %v103 = vpack.c.b16 %v101, %v99
    %vm106 = vcmask 130048
    %v108 = vsel %vm106, %v81, 0
    %110 = vmatprep.subr.bf16.mxu0 %v103
    %111 = vmatpush1.bf16.msra.mxu0 %v102
    %112 = vmatprep.subr.bf16.mxu0 0
    %113 = vmatpush1.bf16.msra.mxu0 0
    %114 = vmatprep.subr.bf16.mxu0 0
    %115 = vmatpush1.bf16.msra.mxu0 0
    %116 = vmatprep.subr.bf16.mxu0 0
    %117 = vmatpush1.bf16.msra.mxu0 0
    %118 = vmatprep.subr.bf16.mxu0 0
    %119 = vmatpush1.bf16.msra.mxu0 0
    %120 = vmatprep.subr.bf16.mxu0 0
    %121 = vmatpush1.bf16.msra.mxu0 0
    %122 = vmatprep.subr.bf16.mxu0 0
    %123 = vmatpush1.bf16.msra.mxu0 0
    %124 = vmatprep.subr.bf16.mxu0 0
    %125 = vmatpush1.bf16.msra.mxu0 0
    %126 = vmatprep.subr.bf16.mxu0 0
    %127 = vmatpush1.bf16.msra.mxu0 0
    %128 = vmatprep.subr.bf16.mxu0 0
    %129 = vmatpush1.bf16.msra.mxu0 0
    %130 = vmatprep.subr.bf16.mxu0 0
    %131 = vmatpush1.bf16.msra.mxu0 0
    %132 = vmatprep.subr.bf16.mxu0 0
    %133 = vmatpush1.bf16.msra.mxu0 0
    %134 = vmatprep.subr.bf16.mxu0 0
    %135 = vmatpush1.bf16.msra.mxu0 0
    %136 = vmatprep.subr.bf16.mxu0 0
    %137 = vmatpush1.bf16.msra.mxu0 0
    %138 = vmatprep.subr.bf16.mxu0 0
    %139 = vmatpush1.bf16.msra.mxu0 0
    %140 = vmatprep.subr.bf16.mxu0 0
    %141 = vmatpush1.bf16.msra.mxu0 0
    %142 = vmatprep.mubr.bf16.mxu0 0
    %143 = vmatmul.mubr.bf16.gmra.mrb[0].mxu0 %v108
    %v144 = vpop.f32.mrb[0].mxu0
    %v145 = vadd.f32 %v89, %v144
    %v146 = vpop.f32.mrb[0].mxu0
    %v147 = vadd.f32 %v93, %v146
    %v148 = vpop.f32.mrb[0].mxu0
    %v149 = vpop.f32.mrb[0].mxu0
    %150 = vdwg.mxu0
    %v151 = vmax.f32 %v145, 0.0
    %v152 = vmax.f32 %v147, 0.0
    %v153 = vpack.c.bf16 %v151, %v151
    %v154 = vpack.c.bf16 %v152, %v152
    %v155 = vld [vmem:[#allocation6] sm:$0xf]
    %v156 = vld [vmem:[#allocation6 + $0x4] sm:$0xf]
    %v157 = vld [vmem:[#allocation6 + $0x8] sm:$0xf]
    %v158 = vld [vmem:[#allocation6 + $0xc] sm:$0xf]
    %v159 = vld [vmem:[#allocation6 + $0x10] sm:$0xf]
    %v160 = vld [vmem:[#allocation6 + $0x14] sm:$0xf]
    %v161 = vld [vmem:[#allocation6 + $0x18] sm:$0xf]
    %v162 = vld [vmem:[#allocation6 + $0x1c] sm:$0xf]
    %v163 = vld [vmem:[#allocation6 + $0x20] sm:$0xf]
    %v164 = vld [vmem:[#allocation6 + $0x24] sm:$0xf]
    %v165 = vld [vmem:[#allocation6 + $0x28] sm:$0xf]
    %v166 = vld [vmem:[#allocation6 + $0x2c] sm:$0xf]
    %v167 = vld [vmem:[#allocation6 + $0x30] sm:$0xf]
    %v168 = vld [vmem:[#allocation6 + $0x34] sm:$0xf]
    %v169 = vld [vmem:[#allocation6 + $0x38] sm:$0xf]
    %v170 = vld [vmem:[#allocation6 + $0x3c] sm:$0xf]
    %v171 = vld [vmem:[#allocation6 + $0x40] sm:$0xf]
    %v172 = vld [vmem:[#allocation6 + $0x44] sm:$0xf]
    %v173 = vld [vmem:[#allocation6 + $0x48] sm:$0xf]
    %v174 = vld [vmem:[#allocation6 + $0x4c] sm:$0xf]
    %v175 = vld [vmem:[#allocation6 + $0x50] sm:$0xf]
    %v176 = vld [vmem:[#allocation6 + $0x54] sm:$0xf]
    %v177 = vld [vmem:[#allocation6 + $0x58] sm:$0xf]
    %v178 = vld [vmem:[#allocation6 + $0x5c] sm:$0xf]
    %v179 = vld [vmem:[#allocation6 + $0x60] sm:$0xf]
    %v180 = vld [vmem:[#allocation6 + $0x64] sm:$0xf]
    %v181 = vld [vmem:[#allocation6 + $0x68] sm:$0xf]
    %v182 = vld [vmem:[#allocation6 + $0x6c] sm:$0xf]
    %v183 = vld [vmem:[#allocation6 + $0x70] sm:$0xf]
    %v184 = vld [vmem:[#allocation6 + $0x74] sm:$0xf]
    %v185 = vld [vmem:[#allocation6 + $0x78] sm:$0xf]
    %v186 = vld [vmem:[#allocation6 + $0x7c] sm:$0xf]
    %v187 = vld [vmem:[%s4] sm:$0x1]
    %v189 = vlaneseq
    %v190 = vshrl.u32 %v189, 7
    %v191 = vsub.s32 0, %v190
    %v192 = vrot.slane %v187, %v191
    %v226 = vunpack.c.l.b16 %v155
    %v227 = vunpack.c.l.b16 %v156
    %v228 = vunpack.c.l.b16 %v157
    %v229 = vunpack.c.l.b16 %v158
    %v230 = vunpack.c.l.b16 %v159
    %v231 = vunpack.c.l.b16 %v160
    %v232 = vunpack.c.l.b16 %v161
    %v233 = vunpack.c.l.b16 %v162
    %v234 = vunpack.c.l.b16 %v163
    %v235 = vunpack.c.l.b16 %v164
    %v236 = vunpack.c.l.b16 %v165
    %v237 = vunpack.c.l.b16 %v166
    %v238 = vunpack.c.l.b16 %v167
    %v239 = vunpack.c.l.b16 %v168
    %v240 = vunpack.c.l.b16 %v169
    %v241 = vunpack.c.l.b16 %v170
    %v242 = vunpack.c.l.b16 %v171
    %v243 = vunpack.c.l.b16 %v172
    %v244 = vunpack.c.l.b16 %v173
    %v245 = vunpack.c.l.b16 %v174
    %v246 = vunpack.c.l.b16 %v175
    %v247 = vunpack.c.l.b16 %v176
    %v248 = vunpack.c.l.b16 %v177
    %v249 = vunpack.c.l.b16 %v178
    %v250 = vunpack.c.l.b16 %v179
    %v251 = vunpack.c.l.b16 %v180
    %v252 = vunpack.c.l.b16 %v181
    %v253 = vunpack.c.l.b16 %v182
    %v254 = vunpack.c.l.b16 %v183
    %v255 = vunpack.c.l.b16 %v184
    %v256 = vunpack.c.l.b16 %v185
    %v257 = vunpack.c.l.b16 %v186
    %v258 = vpack.c.b16 %v227, %v226
    %v259 = vpack.c.b16 %v229, %v228
    %v260 = vpack.c.b16 %v231, %v230
    %v261 = vpack.c.b16 %v233, %v232
    %v262 = vpack.c.b16 %v235, %v234
    %v263 = vpack.c.b16 %v237, %v236
    %v264 = vpack.c.b16 %v239, %v238
    %v265 = vpack.c.b16 %v241, %v240
    %v266 = vpack.c.b16 %v243, %v242
    %v267 = vpack.c.b16 %v245, %v244
    %v268 = vpack.c.b16 %v247, %v246
    %v269 = vpack.c.b16 %v249, %v248
    %v270 = vpack.c.b16 %v251, %v250
    %v271 = vpack.c.b16 %v253, %v252
    %v272 = vpack.c.b16 %v255, %v254
    %v273 = vpack.c.b16 %v257, %v256
    %290 = vmatprep.subr.bf16.mxu0 0
    %291 = vmatpush1.bf16.msra.mxu0 %v258
    %292 = vmatprep.subr.bf16.mxu0 0
    %293 = vmatpush1.bf16.msra.mxu0 %v259
    %294 = vmatprep.subr.bf16.mxu0 0
    %295 = vmatpush1.bf16.msra.mxu0 %v260
    %296 = vmatprep.subr.bf16.mxu0 0
    %297 = vmatpush1.bf16.msra.mxu0 %v261
    %298 = vmatprep.subr.bf16.mxu0 0
    %299 = vmatpush1.bf16.msra.mxu0 %v262
    %300 = vmatprep.subr.bf16.mxu0 0
    %301 = vmatpush1.bf16.msra.mxu0 %v263
    %302 = vmatprep.subr.bf16.mxu0 0
    %303 = vmatpush1.bf16.msra.mxu0 %v264
    %304 = vmatprep.subr.bf16.mxu0 0
    %305 = vmatpush1.bf16.msra.mxu0 %v265
    %306 = vmatprep.subr.bf16.mxu0 0
    %307 = vmatpush1.bf16.msra.mxu0 %v266
    %308 = vmatprep.subr.bf16.mxu0 0
    %309 = vmatpush1.bf16.msra.mxu0 %v267
    %310 = vmatprep.subr.bf16.mxu0 0
    %311 = vmatpush1.bf16.msra.mxu0 %v268
    %312 = vmatprep.subr.bf16.mxu0 0
    %313 = vmatpush1.bf16.msra.mxu0 %v269
    %314 = vmatprep.subr.bf16.mxu0 0
    %315 = vmatpush1.bf16.msra.mxu0 %v270
    %316 = vmatprep.subr.bf16.mxu0 0
    %317 = vmatpush1.bf16.msra.mxu0 %v271
    %318 = vmatprep.subr.bf16.mxu0 0
    %319 = vmatpush1.bf16.msra.mxu0 %v272
    %320 = vmatprep.subr.bf16.mxu0 0
    %321 = vmatpush1.bf16.msra.mxu0 %v273
    %322 = vmatprep.mubr.bf16.mxu0 %v154
    %323 = vmatmul.mubr.bf16.gmra.mrb[0].mxu0 %v153
    %v324 = vpop.f32.mrb[0].mxu0
    %v325 = vadd.f32 %v192, %v324
    %v326 = vpop.f32.mrb[0].mxu0
    %v327 = vpop.f32.mrb[0].mxu0
    %v328 = vpop.f32.mrb[0].mxu0
    %329 = vdwg.mxu0
    %v330 = vmax.f32 %v325, 0.0
    %v331 = vpack.c.bf16 %v330, %v330
    %v332 = vld [vmem:[#allocation7] sm:$0xf]
    %v333 = vld [vmem:[#allocation7 + $0x4] sm:$0xf]
    %v334 = vld [vmem:[#allocation7 + $0x8] sm:$0xf]
    %v335 = vld [vmem:[#allocation7 + $0xc] sm:$0xf]
    %v336 = vld [vmem:[#allocation7 + $0x10] sm:$0xf]
    %v337 = vld [vmem:[#allocation7 + $0x14] sm:$0xf]
    %v338 = vld [vmem:[#allocation7 + $0x18] sm:$0xf]
    %v339 = vld [vmem:[#allocation7 + $0x1c] sm:$0xf]
    %v340 = vld [vmem:[#allocation7 + $0x20] sm:$0xf]
    %v341 = vld [vmem:[#allocation7 + $0x24] sm:$0xf]
    %v342 = vld [vmem:[#allocation7 + $0x28] sm:$0xf]
    %v343 = vld [vmem:[#allocation7 + $0x2c] sm:$0xf]
    %v344 = vld [vmem:[#allocation7 + $0x30] sm:$0xf]
    %v345 = vld [vmem:[#allocation7 + $0x34] sm:$0xf]
    %v346 = vld [vmem:[#allocation7 + $0x38] sm:$0xf]
    %v347 = vld [vmem:[#allocation7 + $0x3c] sm:$0xf]
    %v348 = vld [vmem:[%s6] sm:$0x1]
    %v350 = vlaneseq
    %v351 = vshrl.u32 %v350, 7
    %v352 = vsub.s32 0, %v351
    %v353 = vrot.slane %v348, %v352
    %v371 = vunpack.c.l.b16 %v332
    %v372 = vunpack.c.l.b16 %v333
    %v373 = vunpack.c.l.b16 %v334
    %v374 = vunpack.c.l.b16 %v335
    %v375 = vunpack.c.l.b16 %v336
    %v376 = vunpack.c.l.b16 %v337
    %v377 = vunpack.c.l.b16 %v338
    %v378 = vunpack.c.l.b16 %v339
    %v379 = vunpack.c.l.b16 %v340
    %v380 = vunpack.c.l.b16 %v341
    %v381 = vunpack.c.l.b16 %v342
    %v382 = vunpack.c.l.b16 %v343
    %v383 = vunpack.c.l.b16 %v344
    %v384 = vunpack.c.l.b16 %v345
    %v385 = vunpack.c.l.b16 %v346
    %v386 = vunpack.c.l.b16 %v347
    %v387 = vpack.c.b16 %v372, %v371
    %v388 = vpack.c.b16 %v374, %v373
    %v389 = vpack.c.b16 %v376, %v375
    %v390 = vpack.c.b16 %v378, %v377
    %v391 = vpack.c.b16 %v380, %v379
    %v392 = vpack.c.b16 %v382, %v381
    %v393 = vpack.c.b16 %v384, %v383
    %v394 = vpack.c.b16 %v386, %v385
    %403 = vmatprep.subr.bf16.mxu0 0
    %404 = vmatpush1.bf16.msra.mxu0 %v387
    %405 = vmatprep.subr.bf16.mxu0 0
    %406 = vmatpush1.bf16.msra.mxu0 %v388
    %407 = vmatprep.subr.bf16.mxu0 0
    %408 = vmatpush1.bf16.msra.mxu0 %v389
    %409 = vmatprep.subr.bf16.mxu0 0
    %410 = vmatpush1.bf16.msra.mxu0 %v390
    %411 = vmatprep.subr.bf16.mxu0 0
    %412 = vmatpush1.bf16.msra.mxu0 %v391
    %413 = vmatprep.subr.bf16.mxu0 0
    %414 = vmatpush1.bf16.msra.mxu0 %v392
    %415 = vmatprep.subr.bf16.mxu0 0
    %416 = vmatpush1.bf16.msra.mxu0 %v393
    %417 = vmatprep.subr.bf16.mxu0 0
    %418 = vmatpush1.bf16.msra.mxu0 %v394
    %419 = vmatprep.subr.bf16.mxu0 0
    %420 = vmatpush1.bf16.msra.mxu0 0
    %421 = vmatprep.subr.bf16.mxu0 0
    %422 = vmatpush1.bf16.msra.mxu0 0
    %423 = vmatprep.subr.bf16.mxu0 0
    %424 = vmatpush1.bf16.msra.mxu0 0
    %425 = vmatprep.subr.bf16.mxu0 0
    %426 = vmatpush1.bf16.msra.mxu0 0
    %427 = vmatprep.subr.bf16.mxu0 0
    %428 = vmatpush1.bf16.msra.mxu0 0
    %429 = vmatprep.subr.bf16.mxu0 0
    %430 = vmatpush1.bf16.msra.mxu0 0
    %431 = vmatprep.subr.bf16.mxu0 0
    %432 = vmatpush1.bf16.msra.mxu0 0
    %433 = vmatprep.subr.bf16.mxu0 0
    %434 = vmatpush1.bf16.msra.mxu0 0
    %435 = vmatprep.mubr.bf16.mxu0 0
    %436 = vmatmul.mubr.bf16.gmra.mrb[0].mxu0 %v331
    %v437 = vpop.f32.mrb[0].mxu0
    %v438 = vadd.f32 %v353, %v437
    %v439 = vpop.f32.mrb[0].mxu0
    %v440 = vpop.f32.mrb[0].mxu0
    %v441 = vpop.f32.mrb[0].mxu0
    %442 = vdwg.mxu0
    %v443 = vpack.c.bf16 %v438, %v438
    %444 = vst [vmem:[%s7] sm:$0xf] %v443
    // Predicated region
    $region46: #{simulation_exo_nn_forward.1} parent=1 // pred_check
      _
    $region47: #{simulation_exo_nn_forward.1} parent=1 // pred_check_branch
      %446 = sbr.rel (0) target = $region49
    $region48: #{simulation_exo_nn_forward.1} parent=1 // pred_region
      _
    $region49: #{simulation_exo_nn_forward.1} parent=1 // pred_fallthru
      _
    // Predicated region
    $region50: #{simulation_exo_nn_forward.1} parent=1 // pred_check
      _
    $region51: #{simulation_exo_nn_forward.1} parent=1 // pred_check_branch
      %448 = sbr.rel (0) target = $region53
    $region52: #{simulation_exo_nn_forward.1} parent=1 // pred_region
      _
    $region53: #{simulation_exo_nn_forward.1} parent=1 // pred_fallthru
      _
    %449 = vsyncpa [#allocation3], 1
    %450 = vsyncpa [#allocation5], 1
    %451 = vsyncpa [#allocation8], 1

</llo_original>
